<compile_context>
chip_gen: v5e
topology: v5e:2x2
jax: 0.10.0
libtpu: 0.0.40
codegen_flags: <defaults>
</compile_context>

<pallas_src>
import jax
import jax.numpy as jnp
from jax.experimental import pallas as pl
from jax.experimental.pallas import tpu as pltpu

HIDDEN_UNITS = 10
HIDDEN_LAYERS = 5


def _round_up(n, m):
    return ((n + m - 1) // m) * m


def mlp_kernel(x_ref, w_in_ref, b_in_ref, wh_ref, bh_ref, w_out_ref, b_out_ref,
               o_ref):
    # x_ref: (tile, in_dim) f32; weights pre-transposed to (in, out), f32;
    # biases (1, out) f32; o_ref: (tile, out_dim) f32.
    # Input projection (no activation after it, per the module's layer list).
    h = jnp.dot(x_ref[...], w_in_ref[...],
                preferred_element_type=jnp.float32) + b_in_ref[...]
    # 5 hidden layers: Linear(10,10) + ReLU, unrolled (tiny, fixed count).
    for i in range(HIDDEN_LAYERS):
        h = jnp.dot(h, wh_ref[i], preferred_element_type=jnp.float32) + bh_ref[i]
        h = jnp.maximum(h, 0.0)
    # Output projection (no activation).
    o_ref[...] = (jnp.dot(h, w_out_ref[...],
                          preferred_element_type=jnp.float32)
                  + b_out_ref[...]).astype(o_ref.dtype)


def regularized_mlp_forward(x, params, *, batch_tile=4096):
    """x: (B, in_dim) float32. params: dict of pre-transposed weights/biases."""
    w_in = params["w_in"].astype(jnp.float32)      # (in, 10)
    b_in = params["b_in"].astype(jnp.float32)      # (1, 10)
    wh = params["wh"].astype(jnp.float32)          # (5, 10, 10)
    bh = params["bh"].astype(jnp.float32)          # (5, 1, 10)
    w_out = params["w_out"].astype(jnp.float32)    # (10, out)
    b_out = params["b_out"].astype(jnp.float32)    # (1, out)

    B, in_dim = x.shape
    out_dim = w_out.shape[1]

    # --- Batch tiling.  Clamp the tile to the (sublane-rounded) batch; if that
    # would leave a single grid step for a non-trivial batch, split it in two
    # so the "parallel" axis can be sharded across both v7x TensorCores.
    tile = min(batch_tile, _round_up(B, 8))
    if B > 16 and pl.cdiv(B, tile) < 2:
        tile = _round_up(pl.cdiv(B, 2), 8)
    num_tiles = pl.cdiv(B, tile)  # last block may be partial; Pallas masks it.

    grid = (num_tiles,)

    # Only the batch dimension of x / y is tiled; all parameters are tiny
    # (~3 KB total) and broadcast to every grid step (index_map returns block 0
    # so they are fetched once and re-used).
    in_specs = [
        pl.BlockSpec((tile, in_dim), lambda i: (i, 0)),
        pl.BlockSpec(w_in.shape, lambda i: (0, 0)),
        pl.BlockSpec(b_in.shape, lambda i: (0, 0)),
        pl.BlockSpec(wh.shape, lambda i: (0, 0, 0)),
        pl.BlockSpec(bh.shape, lambda i: (0, 0, 0)),
        pl.BlockSpec(w_out.shape, lambda i: (0, 0)),
        pl.BlockSpec(b_out.shape, lambda i: (0, 0)),
    ]
    # out_dim equals the full last dim of the output array, so (tile, out_dim)
    # is a legal block without any lane padding.
    out_spec = pl.BlockSpec((tile, out_dim), lambda i: (i, 0))

    y = pl.pallas_call(
        mlp_kernel,
        out_shape=jax.ShapeDtypeStruct((B, out_dim), jnp.float32),
        grid_spec=pltpu.PrefetchScalarGridSpec(
            num_scalar_prefetch=0,
            grid=grid,
            in_specs=in_specs,
            out_specs=out_spec,
        ),
        compiler_params=pltpu.CompilerParams(
            dimension_semantics=("parallel",)),
    )(x, w_in, b_in, wh, bh, w_out, b_out)

    return y


def init_params(key, in_dim, out_dim):
    """Deterministic init mimicking nn.Linear (uniform +-1/sqrt(fan_in)).

    Weights are stored already transposed to (in_features, out_features).
    """
    def linear(k, fan_in, fan_out):
        kw, kb = jax.random.split(k)
        bound = 1.0 / jnp.sqrt(fan_in)
        w = jax.random.uniform(kw, (fan_in, fan_out), jnp.float32, -bound, bound)
        b = jax.random.uniform(kb, (1, fan_out), jnp.float32, -bound, bound)
        return w, b

    keys = jax.random.split(key, HIDDEN_LAYERS + 2)
    w_in, b_in = linear(keys[0], in_dim, HIDDEN_UNITS)
    wh_list, bh_list = [], []
    for i in range(HIDDEN_LAYERS):
        w, b = linear(keys[1 + i], HIDDEN_UNITS, HIDDEN_UNITS)
        wh_list.append(w)
        bh_list.append(b)
    w_out, b_out = linear(keys[-1], HIDDEN_UNITS, out_dim)
    return {
        "w_in": w_in, "b_in": b_in,
        "wh": jnp.stack(wh_list, axis=0),            # (5, 10, 10)
        "bh": jnp.stack(bh_list, axis=0),            # (5, 1, 10)
        "w_out": w_out, "b_out": b_out,
    }


def reference_forward(x, params):
    """Pure-JAX f32 reference (same math as the torch module)."""
    hi = jax.lax.Precision.HIGHEST
    h = jnp.dot(x, params["w_in"], precision=hi) + params["b_in"]
    for i in range(HIDDEN_LAYERS):
        h = jnp.dot(h, params["wh"][i], precision=hi) + params["bh"][i]
        h = jnp.maximum(h, 0.0)
    return jnp.dot(h, params["w_out"], precision=hi) + params["b_out"]


if __name__ == "__main__":
    key = jax.random.PRNGKey(0)
    k_param, k_x = jax.random.split(key)

    # units_per_layer = (32, 4): 32 input features, 4 output classes.
    in_dim, out_dim = 32, 4
    batch = 300  # deliberately NOT a multiple of the tile -> exercises the
                 # masked partial edge block (no jnp.pad copy of x).

    params = init_params(k_param, in_dim, out_dim)
    x = jax.random.normal(k_x, (batch, in_dim), dtype=jnp.float32)

    # Small tile for the demo so the grid has several (parallel) steps and a
    # partial trailing block; production default is batch_tile=4096.
    y = regularized_mlp_forward(x, params, batch_tile=128)
    y = jax.block_until_ready(y)

    y_ref = reference_forward(x, params)
    assert y.shape == (batch, out_dim)
    assert jnp.allclose(y, y_ref, atol=2e-2, rtol=2e-2), "mismatch vs reference"

    print("KERNEL_OK")
</pallas_src>

<mosaic_0001>
module attributes {stable_mosaic.version = 11 : i64} {
  func.func @mlp_kernel(%arg0: i32, %arg1: memref<128x32xf32, #tpu.memory_space<vmem>>, %arg2: memref<32x10xf32, #tpu.memory_space<vmem>>, %arg3: memref<1x10xf32, #tpu.memory_space<vmem>>, %arg4: memref<5x10x10xf32, #tpu.memory_space<vmem>>, %arg5: memref<5x1x10xf32, #tpu.memory_space<vmem>>, %arg6: memref<10x4xf32, #tpu.memory_space<vmem>>, %arg7: memref<1x4xf32, #tpu.memory_space<vmem>>, %arg8: memref<128x4xf32, #tpu.memory_space<vmem>>) attributes {dimension_semantics = [#tpu.dimension_semantics<parallel>], iteration_bounds = array<i64: 3>, scalar_prefetch = 0 : i64, scratch_operands = 0 : i64, tpu.core_type = #tpu.core_type<tc>, window_params = [{transform_indices = @transform_0, window_bounds = array<i64: 128, 32>}, {pipeline_mode = #tpu.pipeline_mode<synchronous>, transform_indices = @transform_1, window_bounds = array<i64: 32, 10>}, {pipeline_mode = #tpu.pipeline_mode<synchronous>, transform_indices = @transform_2, window_bounds = array<i64: 1, 10>}, {pipeline_mode = #tpu.pipeline_mode<synchronous>, transform_indices = @transform_3, window_bounds = array<i64: 5, 10, 10>}, {pipeline_mode = #tpu.pipeline_mode<synchronous>, transform_indices = @transform_4, window_bounds = array<i64: 5, 1, 10>}, {pipeline_mode = #tpu.pipeline_mode<synchronous>, transform_indices = @transform_5, window_bounds = array<i64: 10, 4>}, {pipeline_mode = #tpu.pipeline_mode<synchronous>, transform_indices = @transform_6, window_bounds = array<i64: 1, 4>}, {transform_indices = @transform_7, window_bounds = array<i64: 128, 4>}]} {
    %c0 = arith.constant 0 : index
    %c0_0 = arith.constant 0 : index
    %0 = vector.load %arg1[%c0, %c0_0] : memref<128x32xf32, #tpu.memory_space<vmem>>, vector<128x32xf32>
    %c0_1 = arith.constant 0 : index
    %c0_2 = arith.constant 0 : index
    %1 = vector.load %arg2[%c0_1, %c0_2] : memref<32x10xf32, #tpu.memory_space<vmem>>, vector<32x10xf32>
    %cst = arith.constant dense<0.000000e+00> : vector<128x10xf32>
    %2 = tpu.matmul %0, %1, %cst {dimension_numbers = #tpu.dot_dimension_numbers<[1], [0], [0], [1], [0, 0, 1, 1], [], []>} : vector<128x32xf32>, vector<32x10xf32>, vector<128x10xf32> -> vector<128x10xf32>
    %c0_3 = arith.constant 0 : index
    %c0_4 = arith.constant 0 : index
    %3 = vector.load %arg3[%c0_3, %c0_4] : memref<1x10xf32, #tpu.memory_space<vmem>>, vector<1x10xf32>
    %4 = vector.broadcast %3 : vector<1x10xf32> to vector<128x10xf32>
    %5 = arith.addf %2, %4 : vector<128x10xf32>
    %c0_5 = arith.constant 0 : index
    %c0_6 = arith.constant 0 : index
    %c0_7 = arith.constant 0 : index
    %6 = vector.load %arg4[%c0_5, %c0_6, %c0_7] : memref<5x10x10xf32, #tpu.memory_space<vmem>>, vector<1x10x10xf32>
    %7 = vector.shape_cast %6 : vector<1x10x10xf32> to vector<10x10xf32>
    %cst_8 = arith.constant dense<0.000000e+00> : vector<128x10xf32>
    %8 = tpu.matmul %5, %7, %cst_8 {dimension_numbers = #tpu.dot_dimension_numbers<[1], [0], [0], [1], [0, 0, 1, 1], [], []>} : vector<128x10xf32>, vector<10x10xf32>, vector<128x10xf32> -> vector<128x10xf32>
    %c0_9 = arith.constant 0 : index
    %c0_10 = arith.constant 0 : index
    %c0_11 = arith.constant 0 : index
    %9 = vector.load %arg5[%c0_9, %c0_10, %c0_11] : memref<5x1x10xf32, #tpu.memory_space<vmem>>, vector<1x1x10xf32>
    %10 = vector.shape_cast %9 : vector<1x1x10xf32> to vector<1x10xf32>
    %11 = vector.broadcast %10 : vector<1x10xf32> to vector<128x10xf32>
    %12 = arith.addf %8, %11 : vector<128x10xf32>
    %cst_12 = arith.constant 0.000000e+00 : f32
    %13 = vector.broadcast %cst_12 : f32 to vector<128x10xf32>
    %14 = arith.maximumf %12, %13 : vector<128x10xf32>
    %c1 = arith.constant 1 : index
    %c0_13 = arith.constant 0 : index
    %c0_14 = arith.constant 0 : index
    %15 = vector.load %arg4[%c1, %c0_13, %c0_14] : memref<5x10x10xf32, #tpu.memory_space<vmem>>, vector<1x10x10xf32>
    %16 = vector.shape_cast %15 : vector<1x10x10xf32> to vector<10x10xf32>
    %cst_15 = arith.constant dense<0.000000e+00> : vector<128x10xf32>
    %17 = tpu.matmul %14, %16, %cst_15 {dimension_numbers = #tpu.dot_dimension_numbers<[1], [0], [0], [1], [0, 0, 1, 1], [], []>} : vector<128x10xf32>, vector<10x10xf32>, vector<128x10xf32> -> vector<128x10xf32>
    %c1_16 = arith.constant 1 : index
    %c0_17 = arith.constant 0 : index
    %c0_18 = arith.constant 0 : index
    %18 = vector.load %arg5[%c1_16, %c0_17, %c0_18] : memref<5x1x10xf32, #tpu.memory_space<vmem>>, vector<1x1x10xf32>
    %19 = vector.shape_cast %18 : vector<1x1x10xf32> to vector<1x10xf32>
    %20 = vector.broadcast %19 : vector<1x10xf32> to vector<128x10xf32>
    %21 = arith.addf %17, %20 : vector<128x10xf32>
    %cst_19 = arith.constant 0.000000e+00 : f32
    %22 = vector.broadcast %cst_19 : f32 to vector<128x10xf32>
    %23 = arith.maximumf %21, %22 : vector<128x10xf32>
    %c2 = arith.constant 2 : index
    %c0_20 = arith.constant 0 : index
    %c0_21 = arith.constant 0 : index
    %24 = vector.load %arg4[%c2, %c0_20, %c0_21] : memref<5x10x10xf32, #tpu.memory_space<vmem>>, vector<1x10x10xf32>
    %25 = vector.shape_cast %24 : vector<1x10x10xf32> to vector<10x10xf32>
    %cst_22 = arith.constant dense<0.000000e+00> : vector<128x10xf32>
    %26 = tpu.matmul %23, %25, %cst_22 {dimension_numbers = #tpu.dot_dimension_numbers<[1], [0], [0], [1], [0, 0, 1, 1], [], []>} : vector<128x10xf32>, vector<10x10xf32>, vector<128x10xf32> -> vector<128x10xf32>
    %c2_23 = arith.constant 2 : index
    %c0_24 = arith.constant 0 : index
    %c0_25 = arith.constant 0 : index
    %27 = vector.load %arg5[%c2_23, %c0_24, %c0_25] : memref<5x1x10xf32, #tpu.memory_space<vmem>>, vector<1x1x10xf32>
    %28 = vector.shape_cast %27 : vector<1x1x10xf32> to vector<1x10xf32>
    %29 = vector.broadcast %28 : vector<1x10xf32> to vector<128x10xf32>
    %30 = arith.addf %26, %29 : vector<128x10xf32>
    %cst_26 = arith.constant 0.000000e+00 : f32
    %31 = vector.broadcast %cst_26 : f32 to vector<128x10xf32>
    %32 = arith.maximumf %30, %31 : vector<128x10xf32>
    %c3 = arith.constant 3 : index
    %c0_27 = arith.constant 0 : index
    %c0_28 = arith.constant 0 : index
    %33 = vector.load %arg4[%c3, %c0_27, %c0_28] : memref<5x10x10xf32, #tpu.memory_space<vmem>>, vector<1x10x10xf32>
    %34 = vector.shape_cast %33 : vector<1x10x10xf32> to vector<10x10xf32>
    %cst_29 = arith.constant dense<0.000000e+00> : vector<128x10xf32>
    %35 = tpu.matmul %32, %34, %cst_29 {dimension_numbers = #tpu.dot_dimension_numbers<[1], [0], [0], [1], [0, 0, 1, 1], [], []>} : vector<128x10xf32>, vector<10x10xf32>, vector<128x10xf32> -> vector<128x10xf32>
    %c3_30 = arith.constant 3 : index
    %c0_31 = arith.constant 0 : index
    %c0_32 = arith.constant 0 : index
    %36 = vector.load %arg5[%c3_30, %c0_31, %c0_32] : memref<5x1x10xf32, #tpu.memory_space<vmem>>, vector<1x1x10xf32>
    %37 = vector.shape_cast %36 : vector<1x1x10xf32> to vector<1x10xf32>
    %38 = vector.broadcast %37 : vector<1x10xf32> to vector<128x10xf32>
    %39 = arith.addf %35, %38 : vector<128x10xf32>
    %cst_33 = arith.constant 0.000000e+00 : f32
    %40 = vector.broadcast %cst_33 : f32 to vector<128x10xf32>
    %41 = arith.maximumf %39, %40 : vector<128x10xf32>
    %c4 = arith.constant 4 : index
    %c0_34 = arith.constant 0 : index
    %c0_35 = arith.constant 0 : index
    %42 = vector.load %arg4[%c4, %c0_34, %c0_35] : memref<5x10x10xf32, #tpu.memory_space<vmem>>, vector<1x10x10xf32>
    %43 = vector.shape_cast %42 : vector<1x10x10xf32> to vector<10x10xf32>
    %cst_36 = arith.constant dense<0.000000e+00> : vector<128x10xf32>
    %44 = tpu.matmul %41, %43, %cst_36 {dimension_numbers = #tpu.dot_dimension_numbers<[1], [0], [0], [1], [0, 0, 1, 1], [], []>} : vector<128x10xf32>, vector<10x10xf32>, vector<128x10xf32> -> vector<128x10xf32>
    %c4_37 = arith.constant 4 : index
    %c0_38 = arith.constant 0 : index
    %c0_39 = arith.constant 0 : index
    %45 = vector.load %arg5[%c4_37, %c0_38, %c0_39] : memref<5x1x10xf32, #tpu.memory_space<vmem>>, vector<1x1x10xf32>
    %46 = vector.shape_cast %45 : vector<1x1x10xf32> to vector<1x10xf32>
    %47 = vector.broadcast %46 : vector<1x10xf32> to vector<128x10xf32>
    %48 = arith.addf %44, %47 : vector<128x10xf32>
    %cst_40 = arith.constant 0.000000e+00 : f32
    %49 = vector.broadcast %cst_40 : f32 to vector<128x10xf32>
    %50 = arith.maximumf %48, %49 : vector<128x10xf32>
    %c0_41 = arith.constant 0 : index
    %c0_42 = arith.constant 0 : index
    %51 = vector.load %arg6[%c0_41, %c0_42] : memref<10x4xf32, #tpu.memory_space<vmem>>, vector<10x4xf32>
    %cst_43 = arith.constant dense<0.000000e+00> : vector<128x4xf32>
    %52 = tpu.matmul %50, %51, %cst_43 {dimension_numbers = #tpu.dot_dimension_numbers<[1], [0], [0], [1], [0, 0, 1, 1], [], []>} : vector<128x10xf32>, vector<10x4xf32>, vector<128x4xf32> -> vector<128x4xf32>
    %c0_44 = arith.constant 0 : index
    %c0_45 = arith.constant 0 : index
    %53 = vector.load %arg7[%c0_44, %c0_45] : memref<1x4xf32, #tpu.memory_space<vmem>>, vector<1x4xf32>
    %54 = vector.broadcast %53 : vector<1x4xf32> to vector<128x4xf32>
    %55 = arith.addf %52, %54 : vector<128x4xf32>
    %c0_46 = arith.constant 0 : index
    %c0_47 = arith.constant 0 : index
    %56 = vector.load %arg8[%c0_46, %c0_47] : memref<128x4xf32, #tpu.memory_space<vmem>>, vector<128x4xf32>
    tpu.vector_store %arg8[%c0_46, %c0_47], %55 {strides = array<i32>} : memref<128x4xf32, #tpu.memory_space<vmem>>, vector<128x4xf32>,
    return
  }
  func.func @transform_0(%arg0: i32) -> (i32, i32) {
    %c0_i32 = arith.constant 0 : i32
    %c0_i32_0 = arith.constant 0 : i32
    return %arg0, %c0_i32 : i32, i32
  }
  func.func @transform_1(%arg0: i32) -> (i32, i32) {
    %c0_i32 = arith.constant 0 : i32
    %c0_i32_0 = arith.constant 0 : i32
    %c0_i32_1 = arith.constant 0 : i32
    return %c0_i32, %c0_i32_0 : i32, i32
  }
  func.func @transform_2(%arg0: i32) -> (i32, i32) {
    %c0_i32 = arith.constant 0 : i32
    %c0_i32_0 = arith.constant 0 : i32
    %c0_i32_1 = arith.constant 0 : i32
    return %c0_i32, %c0_i32_0 : i32, i32
  }
  func.func @transform_3(%arg0: i32) -> (i32, i32, i32) {
    %c0_i32 = arith.constant 0 : i32
    %c0_i32_0 = arith.constant 0 : i32
    %c0_i32_1 = arith.constant 0 : i32
    %c0_i32_2 = arith.constant 0 : i32
    return %c0_i32, %c0_i32_0, %c0_i32_1 : i32, i32, i32
  }
  func.func @transform_4(%arg0: i32) -> (i32, i32, i32) {
    %c0_i32 = arith.constant 0 : i32
    %c0_i32_0 = arith.constant 0 : i32
    %c0_i32_1 = arith.constant 0 : i32
    %c0_i32_2 = arith.constant 0 : i32
    return %c0_i32, %c0_i32_0, %c0_i32_1 : i32, i32, i32
  }
  func.func @transform_5(%arg0: i32) -> (i32, i32) {
    %c0_i32 = arith.constant 0 : i32
    %c0_i32_0 = arith.constant 0 : i32
    %c0_i32_1 = arith.constant 0 : i32
    return %c0_i32, %c0_i32_0 : i32, i32
  }
  func.func @transform_6(%arg0: i32) -> (i32, i32) {
    %c0_i32 = arith.constant 0 : i32
    %c0_i32_0 = arith.constant 0 : i32
    %c0_i32_1 = arith.constant 0 : i32
    return %c0_i32, %c0_i32_0 : i32, i32
  }
  func.func @transform_7(%arg0: i32) -> (i32, i32) {
    %c0_i32 = arith.constant 0 : i32
    %c0_i32_0 = arith.constant 0 : i32
    return %arg0, %c0_i32 : i32, i32
  }
}

</mosaic_0001>

<llo_original>
// kernel: tpu_custom_call.1
$region0: #{tpu_custom_call.1}
  #allocation0 [shape = 'u32[]', space=smem, size = 0x4, offset = 0x4, fixed_abs, tag = 'smem constant byte address 0x4 - core index']
  #allocation1 [shape = 'u32[72,128]{1,0:T(1,128)}', space=vmem, size = 0x9000, scoped, tag = 'internal scratch']
  %s0 = inlined_call_operand.vmem [shape: f32[300,32], index: 0, kind: input, shape index: {}]
  %s1 = inlined_call_operand.vmem [shape: f32[32,10], index: 1, kind: input, shape index: {}]
  %s2 = inlined_call_operand.vmem [shape: f32[1,10], index: 2, kind: input, shape index: {}]
  %s3 = inlined_call_operand.vmem [shape: f32[5,10,10], index: 3, kind: input, shape index: {}]
  %s4 = inlined_call_operand.vmem [shape: f32[5,1,10], index: 4, kind: input, shape index: {}]
  %s5 = inlined_call_operand.vmem [shape: f32[10,4], index: 5, kind: input, shape index: {}]
  %s6 = inlined_call_operand.vmem [shape: f32[1,4], index: 6, kind: input, shape index: {}]
  %s7 = inlined_call_operand.vmem [shape: f32[300,4], index: 7, kind: output, shape index: {}]
  %s8 = sld [smem:[#allocation0]]
  $region109: #{tpu_custom_call.1} parent=0
    _
  %s10 = ssub.s32 1, %s8
  %s11 = scalar_select 0, %s10, %s8
  $region1: #{tpu_custom_call.1} parent=0
    #allocation2 [shape = 'u8[131072]{0}', space=vmem, size = 0x20000, scoped, tag = 'output window, operand 0']
    loop: start=0, step=1, limit=5
    $region2: #{tpu_custom_call.1} parent=1 // loop_pre_header
      _
    $region3: #{tpu_custom_call.1} parent=1 // loop_header
      %s13 = sphi 0, %s17
      %p14 = scmp.ge.s32.totalorder %s13, 5
      %s23 = sphi 0, %s25
      %s26 = sphi 0, %s23
      %s27 = sphi 0, %s26
      %s43 = sphi 0, %s27
      %s47 = sphi 0, %s47
      %s49 = sphi 0, %s47
      %s50 = sphi 0, %s49
      %s64 = sphi 0, %s50
      %s68 = sphi 0, %s68
      %s70 = sphi 0, %s68
      %s71 = sphi 0, %s70
      %s85 = sphi 0, %s71
      %s89 = sphi 0, %s89
      %s91 = sphi 0, %s89
      %s92 = sphi 0, %s91
      %s106 = sphi 0, %s92
      %s110 = sphi 0, %s110
      %s112 = sphi 0, %s110
      %s113 = sphi 0, %s112
      %s127 = sphi 0, %s113
      %s131 = sphi 0, %s131
      %s133 = sphi 0, %s131
      %s134 = sphi 0, %s133
      %s148 = sphi 0, %s134
      %s152 = sphi 0, %s152
      %s154 = sphi 0, %s152
      %s155 = sphi 0, %s154
      %s169 = sphi 0, %s155
      %s175 = sphi 0, %s177
      %s178 = sphi 0, %s175
      %s179 = sphi 0, %s178
      %s195 = sphi 0, %s179
    $region4: #{tpu_custom_call.1} parent=1 // loop_header_branch
      %16 = sbr.rel (%p14) target = $region8
    $region5: #{tpu_custom_call.1} parent=1 // loop_body
      %s18 = ssub.s32 %s13, 1
      %s19 = ssub.s32 %s13, 2
      %s20 = sadd.s32 %s13, 1
      %s21 = ssub.s32 %s13, %s20
      %p22 = scmp.eq.s32.totalorder %s21, 0
      %s24 = sadd.s32 %s23, 1
      %s25 = scalar_select %p22, %s23, %s24
      %p28 = pneg %p22
      %p29 = scmp.eq.s32.totalorder %s13, 2
      %p30 = por %p28, %p29
      %p31 = scmp.ne.s32.totalorder %s23, %s26
      %p32 = scmp.eq.s32.totalorder %s13, 0
      %p33 = por %p31, %p32
      %p34 = scmp.ne.s32.totalorder %s23, %s26
      %p35 = scmp.eq.s32.totalorder %s18, 2
      %p36 = por %p34, %p35
      %p37 = scmp.ne.s32.totalorder %s26, %s27
      %p38 = scmp.eq.s32.totalorder %s18, 0
      %p39 = por %p37, %p38
      %p40 = scmp.ne.s32.totalorder %s26, %s27
      %p41 = scmp.eq.s32.totalorder %s19, 2
      %p42 = por %p40, %p41
      %p44 = scmp.ne.s32.totalorder %s27, %s43
      %p45 = scmp.eq.s32.totalorder %s19, 0
      %p46 = por %p44, %p45
      %s48 = sadd.s32 %s47, 1
      %p51 = scmp.eq.s32.totalorder %s13, 2
      %p52 = scmp.ne.s32.totalorder %s47, %s49
      %p53 = scmp.eq.s32.totalorder %s13, 0
      %p54 = por %p52, %p53
      %p55 = scmp.ne.s32.totalorder %s47, %s49
      %p56 = scmp.eq.s32.totalorder %s18, 2
      %p57 = por %p55, %p56
      %p58 = scmp.ne.s32.totalorder %s49, %s50
      %p59 = scmp.eq.s32.totalorder %s18, 0
      %p60 = por %p58, %p59
      %p61 = scmp.ne.s32.totalorder %s49, %s50
      %p62 = scmp.eq.s32.totalorder %s19, 2
      %p63 = por %p61, %p62
      %p65 = scmp.ne.s32.totalorder %s50, %s64
      %p66 = scmp.eq.s32.totalorder %s19, 0
      %p67 = por %p65, %p66
      %s69 = sadd.s32 %s68, 1
      %p72 = scmp.eq.s32.totalorder %s13, 2
      %p73 = scmp.ne.s32.totalorder %s68, %s70
      %p74 = scmp.eq.s32.totalorder %s13, 0
      %p75 = por %p73, %p74
      %p76 = scmp.ne.s32.totalorder %s68, %s70
      %p77 = scmp.eq.s32.totalorder %s18, 2
      %p78 = por %p76, %p77
      %p79 = scmp.ne.s32.totalorder %s70, %s71
      %p80 = scmp.eq.s32.totalorder %s18, 0
      %p81 = por %p79, %p80
      %p82 = scmp.ne.s32.totalorder %s70, %s71
      %p83 = scmp.eq.s32.totalorder %s19, 2
      %p84 = por %p82, %p83
      %p86 = scmp.ne.s32.totalorder %s71, %s85
      %p87 = scmp.eq.s32.totalorder %s19, 0
      %p88 = por %p86, %p87
      %s90 = sadd.s32 %s89, 1
      %p93 = scmp.eq.s32.totalorder %s13, 2
      %p94 = scmp.ne.s32.totalorder %s89, %s91
      %p95 = scmp.eq.s32.totalorder %s13, 0
      %p96 = por %p94, %p95
      %p97 = scmp.ne.s32.totalorder %s89, %s91
      %p98 = scmp.eq.s32.totalorder %s18, 2
      %p99 = por %p97, %p98
      %p100 = scmp.ne.s32.totalorder %s91, %s92
      %p101 = scmp.eq.s32.totalorder %s18, 0
      %p102 = por %p100, %p101
      %p103 = scmp.ne.s32.totalorder %s91, %s92
      %p104 = scmp.eq.s32.totalorder %s19, 2
      %p105 = por %p103, %p104
      %p107 = scmp.ne.s32.totalorder %s92, %s106
      %p108 = scmp.eq.s32.totalorder %s19, 0
      %p109 = por %p107, %p108
      %s111 = sadd.s32 %s110, 1
      %p114 = scmp.eq.s32.totalorder %s13, 2
      %p115 = scmp.ne.s32.totalorder %s110, %s112
      %p116 = scmp.eq.s32.totalorder %s13, 0
      %p117 = por %p115, %p116
      %p118 = scmp.ne.s32.totalorder %s110, %s112
      %p119 = scmp.eq.s32.totalorder %s18, 2
      %p120 = por %p118, %p119
      %p121 = scmp.ne.s32.totalorder %s112, %s113
      %p122 = scmp.eq.s32.totalorder %s18, 0
      %p123 = por %p121, %p122
      %p124 = scmp.ne.s32.totalorder %s112, %s113
      %p125 = scmp.eq.s32.totalorder %s19, 2
      %p126 = por %p124, %p125
      %p128 = scmp.ne.s32.totalorder %s113, %s127
      %p129 = scmp.eq.s32.totalorder %s19, 0
      %p130 = por %p128, %p129
      %s132 = sadd.s32 %s131, 1
      %p135 = scmp.eq.s32.totalorder %s13, 2
      %p136 = scmp.ne.s32.totalorder %s131, %s133
      %p137 = scmp.eq.s32.totalorder %s13, 0
      %p138 = por %p136, %p137
      %p139 = scmp.ne.s32.totalorder %s131, %s133
      %p140 = scmp.eq.s32.totalorder %s18, 2
      %p141 = por %p139, %p140
      %p142 = scmp.ne.s32.totalorder %s133, %s134
      %p143 = scmp.eq.s32.totalorder %s18, 0
      %p144 = por %p142, %p143
      %p145 = scmp.ne.s32.totalorder %s133, %s134
      %p146 = scmp.eq.s32.totalorder %s19, 2
      %p147 = por %p145, %p146
      %p149 = scmp.ne.s32.totalorder %s134, %s148
      %p150 = scmp.eq.s32.totalorder %s19, 0
      %p151 = por %p149, %p150
      %s153 = sadd.s32 %s152, 1
      %p156 = scmp.eq.s32.totalorder %s13, 2
      %p157 = scmp.ne.s32.totalorder %s152, %s154
      %p158 = scmp.eq.s32.totalorder %s13, 0
      %p159 = por %p157, %p158
      %p160 = scmp.ne.s32.totalorder %s152, %s154
      %p161 = scmp.eq.s32.totalorder %s18, 2
      %p162 = por %p160, %p161
      %p163 = scmp.ne.s32.totalorder %s154, %s155
      %p164 = scmp.eq.s32.totalorder %s18, 0
      %p165 = por %p163, %p164
      %p166 = scmp.ne.s32.totalorder %s154, %s155
      %p167 = scmp.eq.s32.totalorder %s19, 2
      %p168 = por %p166, %p167
      %p170 = scmp.ne.s32.totalorder %s155, %s169
      %p171 = scmp.eq.s32.totalorder %s19, 0
      %p172 = por %p170, %p171
      %s173 = ssub.s32 %s13, %s20
      %p174 = scmp.eq.s32.totalorder %s173, 0
      %s176 = sadd.s32 %s175, 1
      %s177 = scalar_select %p174, %s175, %s176
      %p180 = pneg %p174
      %p181 = scmp.eq.s32.totalorder %s13, 2
      %p182 = por %p180, %p181
      %p183 = scmp.ne.s32.totalorder %s175, %s178
      %p184 = scmp.eq.s32.totalorder %s13, 0
      %p185 = por %p183, %p184
      %p186 = scmp.ne.s32.totalorder %s175, %s178
      %p187 = scmp.eq.s32.totalorder %s18, 2
      %p188 = por %p186, %p187
      %p189 = scmp.ne.s32.totalorder %s178, %s179
      %p190 = scmp.eq.s32.totalorder %s18, 0
      %p191 = por %p189, %p190
      %p192 = scmp.ne.s32.totalorder %s178, %s179
      %p193 = scmp.eq.s32.totalorder %s19, 2
      %p194 = por %p192, %p193
      %p196 = scmp.ne.s32.totalorder %s179, %s195
      %p197 = scmp.eq.s32.totalorder %s19, 0
      %p198 = por %p196, %p197
      %p199 = scmp.le.s32.totalorder 1, %s13
      %p200 = scmp.lt.s32.totalorder %s13, 4
      %p201 = pnand %p199, %p200
      %p202 = pneg %p201
      // Predicated region
      $region9: #{tpu_custom_call.1} parent=5 // pred_check
        _
      $region10: #{tpu_custom_call.1} parent=5 // pred_check_branch
        %204 = sbr.rel (%p201) target = $region12
      $region11: #{tpu_custom_call.1} parent=5 // pred_region
        %s205 = ssub.s32 %s13, 1
        // Predicated region
        $region13: #{tpu_custom_call.1} parent=11 // pred_check
          %p206 = pneg %p60
        $region14: #{tpu_custom_call.1} parent=11 // pred_check_branch
          %208 = sbr.rel (%p206) target = $region16
        $region15: #{tpu_custom_call.1} parent=11 // pred_region
          _
        $region16: #{tpu_custom_call.1} parent=11 // pred_fallthru
          _
        // Predicated region
        $region17: #{tpu_custom_call.1} parent=11 // pred_check
          %p209 = pneg %p81
        $region18: #{tpu_custom_call.1} parent=11 // pred_check_branch
          %211 = sbr.rel (%p209) target = $region20
        $region19: #{tpu_custom_call.1} parent=11 // pred_region
          _
        $region20: #{tpu_custom_call.1} parent=11 // pred_fallthru
          _
        // Predicated region
        $region21: #{tpu_custom_call.1} parent=11 // pred_check
          %p212 = pneg %p102
        $region22: #{tpu_custom_call.1} parent=11 // pred_check_branch
          %214 = sbr.rel (%p212) target = $region24
        $region23: #{tpu_custom_call.1} parent=11 // pred_region
          _
        $region24: #{tpu_custom_call.1} parent=11 // pred_fallthru
          _
        // Predicated region
        $region25: #{tpu_custom_call.1} parent=11 // pred_check
          %p215 = pneg %p123
        $region26: #{tpu_custom_call.1} parent=11 // pred_check_branch
          %217 = sbr.rel (%p215) target = $region28
        $region27: #{tpu_custom_call.1} parent=11 // pred_region
          _
        $region28: #{tpu_custom_call.1} parent=11 // pred_fallthru
          _
        // Predicated region
        $region29: #{tpu_custom_call.1} parent=11 // pred_check
          %p218 = pneg %p144
        $region30: #{tpu_custom_call.1} parent=11 // pred_check_branch
          %220 = sbr.rel (%p218) target = $region32
        $region31: #{tpu_custom_call.1} parent=11 // pred_region
          _
        $region32: #{tpu_custom_call.1} parent=11 // pred_fallthru
          _
        // Predicated region
        $region33: #{tpu_custom_call.1} parent=11 // pred_check
          %p221 = pneg %p165
        $region34: #{tpu_custom_call.1} parent=11 // pred_check_branch
          %223 = sbr.rel (%p221) target = $region36
        $region35: #{tpu_custom_call.1} parent=11 // pred_region
          _
        $region36: #{tpu_custom_call.1} parent=11 // pred_fallthru
          _
      $region12: #{tpu_custom_call.1} parent=5 // pred_fallthru
        _
      %p224 = scmp.lt.s32.totalorder %s13, 3
      // Predicated region
      $region37: #{tpu_custom_call.1} parent=5 // pred_check
        %p225 = pneg %p224
      $region38: #{tpu_custom_call.1} parent=5 // pred_check_branch
        %227 = sbr.rel (%p225) target = $region40
      $region39: #{tpu_custom_call.1} parent=5 // pred_region
        // Predicated region
        $region41: #{tpu_custom_call.1} parent=39 // pred_check
          %p228 = pneg %p33
        $region42: #{tpu_custom_call.1} parent=39 // pred_check_branch
          %230 = sbr.rel (%p228) target = $region44
        $region43: #{tpu_custom_call.1} parent=39 // pred_region
          %s231 = smul.u32 16, %s13
          %s232 = ssub.s32 38, %s231
          %p233 = scmp.lt.s32.totalorder %s232, 16
          %s234 = scalar_select %p233, %s232, 16
          %s235 = smul.u32 8, %s234
          %p236 = scmp.lt.s32.totalorder %s231, 37
          %s237 = scalar_select %p236, %s231, 37
          %s238 = smul.addr %s237, 8
          %s239 = scalar_lea.vmem %s0, %s238
          %s240 = smul.u32 16, %s13
          %s241 = ssub.s32 38, %s240
          %p242 = scmp.lt.s32.totalorder %s241, 16
          %s243 = scalar_select %p242, %s241, 16
          %s244 = smul.u32 8, %s243
        $region44: #{tpu_custom_call.1} parent=39 // pred_fallthru
          _
      $region40: #{tpu_custom_call.1} parent=5 // pred_fallthru
        _
      %p245 = scmp.le.s32.totalorder 1, %s13
      %p246 = scmp.lt.s32.totalorder %s13, 4
      %p247 = pnand %p245, %p246
      %p248 = pneg %p247
      // Predicated region
      $region45: #{tpu_custom_call.1} parent=5 // pred_check
        _
      $region46: #{tpu_custom_call.1} parent=5 // pred_check_branch
        %250 = sbr.rel (%p247) target = $region48
      $region47: #{tpu_custom_call.1} parent=5 // pred_region
        %s251 = ssub.s32 %s13, 1
        %s252 = smul.u32 16, %s18
        %s253 = ssub.s32 38, %s252
        %p254 = scmp.lt.s32.totalorder %s253, 16
        %s255 = scalar_select %p254, %s253, 16
        %s256 = smul.u32 8, %s255
        %p257 = scmp.lt.s32.totalorder %s252, 37
        %s258 = scalar_select %p257, %s252, 37
        %s259 = smul.addr %s258, 8
        %s260 = scalar_lea.vmem %s0, %s259
        %p261 = pneg %p39
        %p262 = pneg %p36
        %p263 = pneg %p60
        %p264 = pneg %p57
        %p265 = pneg %p81
        %p266 = pneg %p78
        %p267 = pneg %p102
        %p268 = pneg %p99
        %p269 = pneg %p123
        %p270 = pneg %p120
        %p271 = pneg %p144
        %p272 = pneg %p141
        %p273 = pneg %p165
        %p274 = pneg %p162
        %p275 = pneg %p191
        %p276 = pneg %p188
        %s277 = sand.u32 %s178, 1
        %s278 = sand.u32 %s178, 1
        %s279 = smul.addr %s278, 128
        %s280 = scalar_lea.vmem [#allocation2], %s279
        %s281 = smul.u32 16, %s18
        %s282 = ssub.s32 38, %s281
        %p283 = scmp.lt.s32.totalorder %s282, 16
        %s284 = scalar_select %p283, %s282, 16
        %s285 = smul.u32 8, %s284
        %p286 = scmp.lt.s32.totalorder %s281, 37
        %s287 = scalar_select %p286, %s281, 37
        %s288 = smul.addr %s287, 8
        %s289 = scalar_lea.vmem %s0, %s288
        %s290 = smul.u32 16, %s18
        %s291 = ssub.s32 38, %s290
        %p292 = scmp.lt.s32.totalorder %s291, 16
        %s293 = scalar_select %p292, %s291, 16
        %s294 = smul.u32 8, %s293
        %s295 = smul.u32 16, %s18
        %s296 = ssub.s32 38, %s295
        %p297 = scmp.lt.s32.totalorder %s296, 16
        %s298 = scalar_select %p297, %s296, 16
        %s299 = smul.u32 8, %s298
        %v300 = vld [vmem:[%s289] sm:$0xff]
        %v301 = vld [vmem:[%s289 + $0x8] sm:$0xff]
        %v302 = vld [vmem:[%s289 + $0x10] sm:$0xff]
        %v303 = vld [vmem:[%s289 + $0x18] sm:$0xff]
        %v304 = vld [vmem:[%s289 + $0x20] sm:$0xff]
        %v305 = vld [vmem:[%s289 + $0x28] sm:$0xff]
        %v306 = vld [vmem:[%s289 + $0x30] sm:$0xff]
        %v307 = vld [vmem:[%s289 + $0x38] sm:$0xff]
        %v308 = vld [vmem:[%s289 + $0x40] sm:$0xff]
        %v309 = vld [vmem:[%s289 + $0x48] sm:$0xff]
        %v310 = vld [vmem:[%s289 + $0x50] sm:$0xff]
        %v311 = vld [vmem:[%s289 + $0x58] sm:$0xff]
        %v312 = vld [vmem:[%s289 + $0x60] sm:$0xff]
        %v313 = vld [vmem:[%s289 + $0x68] sm:$0xff]
        %v314 = vld [vmem:[%s289 + $0x70] sm:$0xff]
        %v315 = vld [vmem:[%s289 + $0x78] sm:$0xff]
        %v316 = vld [vmem:[%s1] sm:$0xff]
        %v317 = vld [vmem:[%s1 + $0x8] sm:$0xff]
        %v318 = vld [vmem:[%s1 + $0x10] sm:$0xff]
        %v319 = vld [vmem:[%s1 + $0x18] sm:$0xff]
        %v320 = vld [vmem:[%s2] sm:$0x1]
        %v322 = vperm.slane %v320, 0
        %vm324 = vcmask 261120
        %v326 = vsel %vm324, %v300, 0
        %v329 = vsel %vm324, %v301, 0
        %v332 = vsel %vm324, %v302, 0
        %v335 = vsel %vm324, %v303, 0
        %v338 = vsel %vm324, %v304, 0
        %v341 = vsel %vm324, %v305, 0
        %v344 = vsel %vm324, %v306, 0
        %v347 = vsel %vm324, %v307, 0
        %v350 = vsel %vm324, %v308, 0
        %v353 = vsel %vm324, %v309, 0
        %v356 = vsel %vm324, %v310, 0
        %v359 = vsel %vm324, %v311, 0
        %v362 = vsel %vm324, %v312, 0
        %v365 = vsel %vm324, %v313, 0
        %v368 = vsel %vm324, %v314, 0
        %v371 = vsel %vm324, %v315, 0
        %373 = vmatpush.msra.mxu0 0.0
        %374 = vmatpush.msra.mxu0 0.0
        %375 = vmatpush.msra.mxu0 0.0
        %376 = vmatpush.msra.mxu0 0.0
        %377 = vmatpush.msra.mxu0 0.0
        %378 = vmatpush.msra.mxu0 0.0
        %379 = vmatpush.msra.mxu0 0.0
        %380 = vmatpush.msra.mxu0 0.0
        %381 = vmatpush.msra.mxu0 0.0
        %382 = vmatpush.msra.mxu0 0.0
        %383 = vmatpush.msra.mxu0 0.0
        %384 = vmatpush.msra.mxu0 0.0
        %385 = vmatpush.msra.mxu0 %v319
        %386 = vmatpush.msra.mxu0 %v318
        %387 = vmatpush.msra.mxu0 %v317
        %388 = vmatpush.msra.mxu0 %v316
        %389 = vmatmul.f32.gmra.mxu0 %v326
        %v390 = vpop.f32.mrf.mxu0
        %v391 = vadd.f32 %v322, %v390
        %392 = vmatmul.f32.gmra.mxu0 %v329
        %v393 = vpop.f32.mrf.mxu0
        %v394 = vadd.f32 %v322, %v393
        %395 = vmatmul.f32.gmra.mxu0 %v332
        %v396 = vpop.f32.mrf.mxu0
        %v397 = vadd.f32 %v322, %v396
        %398 = vmatmul.f32.gmra.mxu0 %v335
        %v399 = vpop.f32.mrf.mxu0
        %v400 = vadd.f32 %v322, %v399
        %401 = vmatmul.f32.gmra.mxu0 %v338
        %v402 = vpop.f32.mrf.mxu0
        %v403 = vadd.f32 %v322, %v402
        %404 = vmatmul.f32.gmra.mxu0 %v341
        %v405 = vpop.f32.mrf.mxu0
        %v406 = vadd.f32 %v322, %v405
        %407 = vmatmul.f32.gmra.mxu0 %v344
        %v408 = vpop.f32.mrf.mxu0
        %v409 = vadd.f32 %v322, %v408
        %410 = vmatmul.f32.gmra.mxu0 %v347
        %v411 = vpop.f32.mrf.mxu0
        %v412 = vadd.f32 %v322, %v411
        %413 = vmatmul.f32.gmra.mxu0 %v350
        %v414 = vpop.f32.mrf.mxu0
        %v415 = vadd.f32 %v322, %v414
        %416 = vmatmul.f32.gmra.mxu0 %v353
        %v417 = vpop.f32.mrf.mxu0
        %v418 = vadd.f32 %v322, %v417
        %419 = vmatmul.f32.gmra.mxu0 %v356
        %v420 = vpop.f32.mrf.mxu0
        %v421 = vadd.f32 %v322, %v420
        %422 = vmatmul.f32.gmra.mxu0 %v359
        %v423 = vpop.f32.mrf.mxu0
        %v424 = vadd.f32 %v322, %v423
        %425 = vmatmul.f32.gmra.mxu0 %v362
        %v426 = vpop.f32.mrf.mxu0
        %v427 = vadd.f32 %v322, %v426
        %428 = vmatmul.f32.gmra.mxu0 %v365
        %v429 = vpop.f32.mrf.mxu0
        %v430 = vadd.f32 %v322, %v429
        %431 = vmatmul.f32.gmra.mxu0 %v368
        %v432 = vpop.f32.mrf.mxu0
        %v433 = vadd.f32 %v322, %v432
        %434 = vmatmul.f32.gmra.mxu0 %v371
        %v435 = vpop.f32.mrf.mxu0
        %v436 = vadd.f32 %v322, %v435
        %437 = vdwg.mxu0
        %v438 = vld [vmem:[%s3] sm:$0xff]
        %v439 = vld [vmem:[%s3 + $0x8] sm:$0x3]
        %v440 = vld [vmem:[%s4] sm:$0x1]
        %v442 = vperm.slane %v440, 0
        %vm444 = vcmask 80896
        %v446 = vsel %vm444, %v391, 0
        %v449 = vsel %vm444, %v394, 0
        %v452 = vsel %vm444, %v397, 0
        %v455 = vsel %vm444, %v400, 0
        %v458 = vsel %vm444, %v403, 0
        %v461 = vsel %vm444, %v406, 0
        %v464 = vsel %vm444, %v409, 0
        %v467 = vsel %vm444, %v412, 0
        %v470 = vsel %vm444, %v415, 0
        %v473 = vsel %vm444, %v418, 0
        %v476 = vsel %vm444, %v421, 0
        %v479 = vsel %vm444, %v424, 0
        %v482 = vsel %vm444, %v427, 0
        %v485 = vsel %vm444, %v430, 0
        %v488 = vsel %vm444, %v433, 0
        %v491 = vsel %vm444, %v436, 0
        %vm493 = vcmask 1041408
        %v495 = vsel %vm493, %v439, 0
        %497 = vmatpush.msra.mxu0 0.0
        %498 = vmatpush.msra.mxu0 0.0
        %499 = vmatpush.msra.mxu0 0.0
        %500 = vmatpush.msra.mxu0 0.0
        %501 = vmatpush.msra.mxu0 0.0
        %502 = vmatpush.msra.mxu0 0.0
        %503 = vmatpush.msra.mxu0 0.0
        %504 = vmatpush.msra.mxu0 0.0
        %505 = vmatpush.msra.mxu0 0.0
        %506 = vmatpush.msra.mxu0 0.0
        %507 = vmatpush.msra.mxu0 0.0
        %508 = vmatpush.msra.mxu0 0.0
        %509 = vmatpush.msra.mxu0 0.0
        %510 = vmatpush.msra.mxu0 0.0
        %511 = vmatpush.msra.mxu0 %v495
        %512 = vmatpush.msra.mxu0 %v438
        %513 = vmatmul.f32.gmra.mxu0 %v446
        %v514 = vpop.f32.mrf.mxu0
        %v515 = vadd.f32 %v442, %v514
        %516 = vmatmul.f32.gmra.mxu0 %v449
        %v517 = vpop.f32.mrf.mxu0
        %v518 = vadd.f32 %v442, %v517
        %519 = vmatmul.f32.gmra.mxu0 %v452
        %v520 = vpop.f32.mrf.mxu0
        %v521 = vadd.f32 %v442, %v520
        %522 = vmatmul.f32.gmra.mxu0 %v455
        %v523 = vpop.f32.mrf.mxu0
        %v524 = vadd.f32 %v442, %v523
        %525 = vmatmul.f32.gmra.mxu0 %v458
        %v526 = vpop.f32.mrf.mxu0
        %v527 = vadd.f32 %v442, %v526
        %528 = vmatmul.f32.gmra.mxu0 %v461
        %v529 = vpop.f32.mrf.mxu0
        %v530 = vadd.f32 %v442, %v529
        %531 = vmatmul.f32.gmra.mxu0 %v464
        %v532 = vpop.f32.mrf.mxu0
        %v533 = vadd.f32 %v442, %v532
        %534 = vmatmul.f32.gmra.mxu0 %v467
        %v535 = vpop.f32.mrf.mxu0
        %v536 = vadd.f32 %v442, %v535
        %537 = vmatmul.f32.gmra.mxu0 %v470
        %v538 = vpop.f32.mrf.mxu0
        %v539 = vadd.f32 %v442, %v538
        %540 = vmatmul.f32.gmra.mxu0 %v473
        %v541 = vpop.f32.mrf.mxu0
        %v542 = vadd.f32 %v442, %v541
        %543 = vmatmul.f32.gmra.mxu0 %v476
        %v544 = vpop.f32.mrf.mxu0
        %v545 = vadd.f32 %v442, %v544
        %546 = vmatmul.f32.gmra.mxu0 %v479
        %v547 = vpop.f32.mrf.mxu0
        %v548 = vadd.f32 %v442, %v547
        %549 = vmatmul.f32.gmra.mxu0 %v482
        %v550 = vpop.f32.mrf.mxu0
        %v551 = vadd.f32 %v442, %v550
        %552 = vmatmul.f32.gmra.mxu0 %v485
        %v553 = vpop.f32.mrf.mxu0
        %v554 = vadd.f32 %v442, %v553
        %555 = vmatmul.f32.gmra.mxu0 %v488
        %v556 = vpop.f32.mrf.mxu0
        %v557 = vadd.f32 %v442, %v556
        %558 = vmatmul.f32.gmra.mxu0 %v491
        %v559 = vpop.f32.mrf.mxu0
        %v560 = vadd.f32 %v442, %v559
        %561 = vdwg.mxu0
        %v562 = vmax.f32 %v515, 0.0
        %v563 = vmax.f32 %v518, 0.0
        %v564 = vmax.f32 %v521, 0.0
        %v565 = vmax.f32 %v524, 0.0
        %v566 = vmax.f32 %v527, 0.0
        %v567 = vmax.f32 %v530, 0.0
        %v568 = vmax.f32 %v533, 0.0
        %v569 = vmax.f32 %v536, 0.0
        %v570 = vmax.f32 %v539, 0.0
        %v571 = vmax.f32 %v542, 0.0
        %v572 = vmax.f32 %v545, 0.0
        %v573 = vmax.f32 %v548, 0.0
        %v574 = vmax.f32 %v551, 0.0
        %v575 = vmax.f32 %v554, 0.0
        %v576 = vmax.f32 %v557, 0.0
        %v577 = vmax.f32 %v560, 0.0
        %s578 = scalar_lea.vmem %s3, 16
        %v579 = vld [vmem:[%s578] sm:$0xff]
        %v580 = vld [vmem:[%s578 + $0x8] sm:$0x3]
        %s581 = scalar_lea.vmem %s4, 1
        %v582 = vld [vmem:[%s581] sm:$0x1]
        %v584 = vperm.slane %v582, 0
        %v587 = vsel %vm444, %v562, 0
        %v590 = vsel %vm444, %v563, 0
        %v593 = vsel %vm444, %v564, 0
        %v596 = vsel %vm444, %v565, 0
        %v599 = vsel %vm444, %v566, 0
        %v602 = vsel %vm444, %v567, 0
        %v605 = vsel %vm444, %v568, 0
        %v608 = vsel %vm444, %v569, 0
        %v611 = vsel %vm444, %v570, 0
        %v614 = vsel %vm444, %v571, 0
        %v617 = vsel %vm444, %v572, 0
        %v620 = vsel %vm444, %v573, 0
        %v623 = vsel %vm444, %v574, 0
        %v626 = vsel %vm444, %v575, 0
        %v629 = vsel %vm444, %v576, 0
        %v632 = vsel %vm444, %v577, 0
        %v635 = vsel %vm493, %v580, 0
        %637 = vmatpush.msra.mxu0 0.0
        %638 = vmatpush.msra.mxu0 0.0
        %639 = vmatpush.msra.mxu0 0.0
        %640 = vmatpush.msra.mxu0 0.0
        %641 = vmatpush.msra.mxu0 0.0
        %642 = vmatpush.msra.mxu0 0.0
        %643 = vmatpush.msra.mxu0 0.0
        %644 = vmatpush.msra.mxu0 0.0
        %645 = vmatpush.msra.mxu0 0.0
        %646 = vmatpush.msra.mxu0 0.0
        %647 = vmatpush.msra.mxu0 0.0
        %648 = vmatpush.msra.mxu0 0.0
        %649 = vmatpush.msra.mxu0 0.0
        %650 = vmatpush.msra.mxu0 0.0
        %651 = vmatpush.msra.mxu0 %v635
        %652 = vmatpush.msra.mxu0 %v579
        %653 = vmatmul.f32.gmra.mxu0 %v587
        %v654 = vpop.f32.mrf.mxu0
        %v655 = vadd.f32 %v584, %v654
        %656 = vmatmul.f32.gmra.mxu0 %v590
        %v657 = vpop.f32.mrf.mxu0
        %v658 = vadd.f32 %v584, %v657
        %659 = vmatmul.f32.gmra.mxu0 %v593
        %v660 = vpop.f32.mrf.mxu0
        %v661 = vadd.f32 %v584, %v660
        %662 = vmatmul.f32.gmra.mxu0 %v596
        %v663 = vpop.f32.mrf.mxu0
        %v664 = vadd.f32 %v584, %v663
        %665 = vmatmul.f32.gmra.mxu0 %v599
        %v666 = vpop.f32.mrf.mxu0
        %v667 = vadd.f32 %v584, %v666
        %668 = vmatmul.f32.gmra.mxu0 %v602
        %v669 = vpop.f32.mrf.mxu0
        %v670 = vadd.f32 %v584, %v669
        %671 = vmatmul.f32.gmra.mxu0 %v605
        %v672 = vpop.f32.mrf.mxu0
        %v673 = vadd.f32 %v584, %v672
        %674 = vmatmul.f32.gmra.mxu0 %v608
        %v675 = vpop.f32.mrf.mxu0
        %v676 = vadd.f32 %v584, %v675
        %677 = vmatmul.f32.gmra.mxu0 %v611
        %v678 = vpop.f32.mrf.mxu0
        %v679 = vadd.f32 %v584, %v678
        %680 = vmatmul.f32.gmra.mxu0 %v614
        %v681 = vpop.f32.mrf.mxu0
        %v682 = vadd.f32 %v584, %v681
        %683 = vmatmul.f32.gmra.mxu0 %v617
        %v684 = vpop.f32.mrf.mxu0
        %v685 = vadd.f32 %v584, %v684
        %686 = vmatmul.f32.gmra.mxu0 %v620
        %v687 = vpop.f32.mrf.mxu0
        %v688 = vadd.f32 %v584, %v687
        %689 = vmatmul.f32.gmra.mxu0 %v623
        %v690 = vpop.f32.mrf.mxu0
        %v691 = vadd.f32 %v584, %v690
        %692 = vmatmul.f32.gmra.mxu0 %v626
        %v693 = vpop.f32.mrf.mxu0
        %v694 = vadd.f32 %v584, %v693
        %695 = vmatmul.f32.gmra.mxu0 %v629
        %v696 = vpop.f32.mrf.mxu0
        %v697 = vadd.f32 %v584, %v696
        %698 = vmatmul.f32.gmra.mxu0 %v632
        %v699 = vpop.f32.mrf.mxu0
        %v700 = vadd.f32 %v584, %v699
        %701 = vdwg.mxu0
        %v702 = vmax.f32 %v655, 0.0
        %v703 = vmax.f32 %v658, 0.0
        %v704 = vmax.f32 %v661, 0.0
        %v705 = vmax.f32 %v664, 0.0
        %v706 = vmax.f32 %v667, 0.0
        %v707 = vmax.f32 %v670, 0.0
        %v708 = vmax.f32 %v673, 0.0
        %v709 = vmax.f32 %v676, 0.0
        %v710 = vmax.f32 %v679, 0.0
        %v711 = vmax.f32 %v682, 0.0
        %v712 = vmax.f32 %v685, 0.0
        %v713 = vmax.f32 %v688, 0.0
        %v714 = vmax.f32 %v691, 0.0
        %v715 = vmax.f32 %v694, 0.0
        %v716 = vmax.f32 %v697, 0.0
        %v717 = vmax.f32 %v700, 0.0
        %s718 = scalar_lea.vmem %s3, 32
        %v719 = vld [vmem:[%s718] sm:$0xff]
        %v720 = vld [vmem:[%s718 + $0x8] sm:$0x3]
        %s721 = scalar_lea.vmem %s4, 2
        %v722 = vld [vmem:[%s721] sm:$0x1]
        %v724 = vperm.slane %v722, 0
        %v727 = vsel %vm444, %v702, 0
        %v730 = vsel %vm444, %v703, 0
        %v733 = vsel %vm444, %v704, 0
        %v736 = vsel %vm444, %v705, 0
        %v739 = vsel %vm444, %v706, 0
        %v742 = vsel %vm444, %v707, 0
        %v745 = vsel %vm444, %v708, 0
        %v748 = vsel %vm444, %v709, 0
        %v751 = vsel %vm444, %v710, 0
        %v754 = vsel %vm444, %v711, 0
        %v757 = vsel %vm444, %v712, 0
        %v760 = vsel %vm444, %v713, 0
        %v763 = vsel %vm444, %v714, 0
        %v766 = vsel %vm444, %v715, 0
        %v769 = vsel %vm444, %v716, 0
        %v772 = vsel %vm444, %v717, 0
        %v775 = vsel %vm493, %v720, 0
        %777 = vmatpush.msra.mxu0 0.0
        %778 = vmatpush.msra.mxu0 0.0
        %779 = vmatpush.msra.mxu0 0.0
        %780 = vmatpush.msra.mxu0 0.0
        %781 = vmatpush.msra.mxu0 0.0
        %782 = vmatpush.msra.mxu0 0.0
        %783 = vmatpush.msra.mxu0 0.0
        %784 = vmatpush.msra.mxu0 0.0
        %785 = vmatpush.msra.mxu0 0.0
        %786 = vmatpush.msra.mxu0 0.0
        %787 = vmatpush.msra.mxu0 0.0
        %788 = vmatpush.msra.mxu0 0.0
        %789 = vmatpush.msra.mxu0 0.0
        %790 = vmatpush.msra.mxu0 0.0
        %791 = vmatpush.msra.mxu0 %v775
        %792 = vmatpush.msra.mxu0 %v719
        %793 = vmatmul.f32.gmra.mxu0 %v727
        %v794 = vpop.f32.mrf.mxu0
        %v795 = vadd.f32 %v724, %v794
        %796 = vmatmul.f32.gmra.mxu0 %v730
        %v797 = vpop.f32.mrf.mxu0
        %v798 = vadd.f32 %v724, %v797
        %799 = vmatmul.f32.gmra.mxu0 %v733
        %v800 = vpop.f32.mrf.mxu0
        %v801 = vadd.f32 %v724, %v800
        %802 = vmatmul.f32.gmra.mxu0 %v736
        %v803 = vpop.f32.mrf.mxu0
        %v804 = vadd.f32 %v724, %v803
        %805 = vmatmul.f32.gmra.mxu0 %v739
        %v806 = vpop.f32.mrf.mxu0
        %v807 = vadd.f32 %v724, %v806
        %808 = vmatmul.f32.gmra.mxu0 %v742
        %v809 = vpop.f32.mrf.mxu0
        %v810 = vadd.f32 %v724, %v809
        %811 = vmatmul.f32.gmra.mxu0 %v745
        %v812 = vpop.f32.mrf.mxu0
        %v813 = vadd.f32 %v724, %v812
        %814 = vmatmul.f32.gmra.mxu0 %v748
        %v815 = vpop.f32.mrf.mxu0
        %v816 = vadd.f32 %v724, %v815
        %817 = vmatmul.f32.gmra.mxu0 %v751
        %v818 = vpop.f32.mrf.mxu0
        %v819 = vadd.f32 %v724, %v818
        %820 = vmatmul.f32.gmra.mxu0 %v754
        %v821 = vpop.f32.mrf.mxu0
        %v822 = vadd.f32 %v724, %v821
        %823 = vmatmul.f32.gmra.mxu0 %v757
        %v824 = vpop.f32.mrf.mxu0
        %v825 = vadd.f32 %v724, %v824
        %826 = vmatmul.f32.gmra.mxu0 %v760
        %v827 = vpop.f32.mrf.mxu0
        %v828 = vadd.f32 %v724, %v827
        %829 = vmatmul.f32.gmra.mxu0 %v763
        %v830 = vpop.f32.mrf.mxu0
        %v831 = vadd.f32 %v724, %v830
        %832 = vmatmul.f32.gmra.mxu0 %v766
        %v833 = vpop.f32.mrf.mxu0
        %v834 = vadd.f32 %v724, %v833
        %835 = vmatmul.f32.gmra.mxu0 %v769
        %v836 = vpop.f32.mrf.mxu0
        %v837 = vadd.f32 %v724, %v836
        %838 = vmatmul.f32.gmra.mxu0 %v772
        %v839 = vpop.f32.mrf.mxu0
        %v840 = vadd.f32 %v724, %v839
        %841 = vdwg.mxu0
        %v842 = vmax.f32 %v795, 0.0
        %v843 = vmax.f32 %v798, 0.0
        %v844 = vmax.f32 %v801, 0.0
        %v845 = vmax.f32 %v804, 0.0
        %v846 = vmax.f32 %v807, 0.0
        %v847 = vmax.f32 %v810, 0.0
        %v848 = vmax.f32 %v813, 0.0
        %v849 = vmax.f32 %v816, 0.0
        %v850 = vmax.f32 %v819, 0.0
        %v851 = vmax.f32 %v822, 0.0
        %v852 = vmax.f32 %v825, 0.0
        %v853 = vmax.f32 %v828, 0.0
        %v854 = vmax.f32 %v831, 0.0
        %v855 = vmax.f32 %v834, 0.0
        %v856 = vmax.f32 %v837, 0.0
        %v857 = vmax.f32 %v840, 0.0
        %s858 = scalar_lea.vmem %s3, 48
        %v859 = vld [vmem:[%s858] sm:$0xff]
        %v860 = vld [vmem:[%s858 + $0x8] sm:$0x3]
        %s861 = scalar_lea.vmem %s4, 3
        %v862 = vld [vmem:[%s861] sm:$0x1]
        %v864 = vperm.slane %v862, 0
        %v867 = vsel %vm444, %v842, 0
        %v870 = vsel %vm444, %v843, 0
        %v873 = vsel %vm444, %v844, 0
        %v876 = vsel %vm444, %v845, 0
        %v879 = vsel %vm444, %v846, 0
        %v882 = vsel %vm444, %v847, 0
        %v885 = vsel %vm444, %v848, 0
        %v888 = vsel %vm444, %v849, 0
        %v891 = vsel %vm444, %v850, 0
        %v894 = vsel %vm444, %v851, 0
        %v897 = vsel %vm444, %v852, 0
        %v900 = vsel %vm444, %v853, 0
        %v903 = vsel %vm444, %v854, 0
        %v906 = vsel %vm444, %v855, 0
        %v909 = vsel %vm444, %v856, 0
        %v912 = vsel %vm444, %v857, 0
        %v915 = vsel %vm493, %v860, 0
        %917 = vmatpush.msra.mxu0 0.0
        %918 = vmatpush.msra.mxu0 0.0
        %919 = vmatpush.msra.mxu0 0.0
        %920 = vmatpush.msra.mxu0 0.0
        %921 = vmatpush.msra.mxu0 0.0
        %922 = vmatpush.msra.mxu0 0.0
        %923 = vmatpush.msra.mxu0 0.0
        %924 = vmatpush.msra.mxu0 0.0
        %925 = vmatpush.msra.mxu0 0.0
        %926 = vmatpush.msra.mxu0 0.0
        %927 = vmatpush.msra.mxu0 0.0
        %928 = vmatpush.msra.mxu0 0.0
        %929 = vmatpush.msra.mxu0 0.0
        %930 = vmatpush.msra.mxu0 0.0
        %931 = vmatpush.msra.mxu0 %v915
        %932 = vmatpush.msra.mxu0 %v859
        %933 = vmatmul.f32.gmra.mxu0 %v867
        %v934 = vpop.f32.mrf.mxu0
        %v935 = vadd.f32 %v864, %v934
        %936 = vmatmul.f32.gmra.mxu0 %v870
        %v937 = vpop.f32.mrf.mxu0
        %v938 = vadd.f32 %v864, %v937
        %939 = vmatmul.f32.gmra.mxu0 %v873
        %v940 = vpop.f32.mrf.mxu0
        %v941 = vadd.f32 %v864, %v940
        %942 = vmatmul.f32.gmra.mxu0 %v876
        %v943 = vpop.f32.mrf.mxu0
        %v944 = vadd.f32 %v864, %v943
        %945 = vmatmul.f32.gmra.mxu0 %v879
        %v946 = vpop.f32.mrf.mxu0
        %v947 = vadd.f32 %v864, %v946
        %948 = vmatmul.f32.gmra.mxu0 %v882
        %v949 = vpop.f32.mrf.mxu0
        %v950 = vadd.f32 %v864, %v949
        %951 = vmatmul.f32.gmra.mxu0 %v885
        %v952 = vpop.f32.mrf.mxu0
        %v953 = vadd.f32 %v864, %v952
        %954 = vmatmul.f32.gmra.mxu0 %v888
        %v955 = vpop.f32.mrf.mxu0
        %v956 = vadd.f32 %v864, %v955
        %957 = vmatmul.f32.gmra.mxu0 %v891
        %v958 = vpop.f32.mrf.mxu0
        %v959 = vadd.f32 %v864, %v958
        %960 = vmatmul.f32.gmra.mxu0 %v894
        %v961 = vpop.f32.mrf.mxu0
        %v962 = vadd.f32 %v864, %v961
        %963 = vmatmul.f32.gmra.mxu0 %v897
        %v964 = vpop.f32.mrf.mxu0
        %v965 = vadd.f32 %v864, %v964
        %966 = vmatmul.f32.gmra.mxu0 %v900
        %v967 = vpop.f32.mrf.mxu0
        %v968 = vadd.f32 %v864, %v967
        %969 = vmatmul.f32.gmra.mxu0 %v903
        %v970 = vpop.f32.mrf.mxu0
        %v971 = vadd.f32 %v864, %v970
        %972 = vmatmul.f32.gmra.mxu0 %v906
        %v973 = vpop.f32.mrf.mxu0
        %v974 = vadd.f32 %v864, %v973
        %975 = vmatmul.f32.gmra.mxu0 %v909
        %v976 = vpop.f32.mrf.mxu0
        %v977 = vadd.f32 %v864, %v976
        %978 = vmatmul.f32.gmra.mxu0 %v912
        %v979 = vpop.f32.mrf.mxu0
        %v980 = vadd.f32 %v864, %v979
        %981 = vdwg.mxu0
        %v982 = vmax.f32 %v935, 0.0
        %v983 = vmax.f32 %v938, 0.0
        %v984 = vmax.f32 %v941, 0.0
        %v985 = vmax.f32 %v944, 0.0
        %v986 = vmax.f32 %v947, 0.0
        %v987 = vmax.f32 %v950, 0.0
        %v988 = vmax.f32 %v953, 0.0
        %v989 = vmax.f32 %v956, 0.0
        %v990 = vmax.f32 %v959, 0.0
        %v991 = vmax.f32 %v962, 0.0
        %v992 = vmax.f32 %v965, 0.0
        %v993 = vmax.f32 %v968, 0.0
        %v994 = vmax.f32 %v971, 0.0
        %v995 = vmax.f32 %v974, 0.0
        %v996 = vmax.f32 %v977, 0.0
        %v997 = vmax.f32 %v980, 0.0
        %s998 = scalar_lea.vmem %s3, 64
        %v999 = vld [vmem:[%s998] sm:$0xff]
        %v1000 = vld [vmem:[%s998 + $0x8] sm:$0x3]
        %s1001 = scalar_lea.vmem %s4, 4
        %v1002 = vld [vmem:[%s1001] sm:$0x1]
        %v1004 = vperm.slane %v1002, 0
        %v1007 = vsel %vm444, %v982, 0
        %v1010 = vsel %vm444, %v983, 0
        %v1013 = vsel %vm444, %v984, 0
        %v1016 = vsel %vm444, %v985, 0
        %v1019 = vsel %vm444, %v986, 0
        %v1022 = vsel %vm444, %v987, 0
        %v1025 = vsel %vm444, %v988, 0
        %v1028 = vsel %vm444, %v989, 0
        %v1031 = vsel %vm444, %v990, 0
        %v1034 = vsel %vm444, %v991, 0
        %v1037 = vsel %vm444, %v992, 0
        %v1040 = vsel %vm444, %v993, 0
        %v1043 = vsel %vm444, %v994, 0
        %v1046 = vsel %vm444, %v995, 0
        %v1049 = vsel %vm444, %v996, 0
        %v1052 = vsel %vm444, %v997, 0
        %v1055 = vsel %vm493, %v1000, 0
        %1057 = vmatpush.msra.mxu0 0.0
        %1058 = vmatpush.msra.mxu0 0.0
        %1059 = vmatpush.msra.mxu0 0.0
        %1060 = vmatpush.msra.mxu0 0.0
        %1061 = vmatpush.msra.mxu0 0.0
        %1062 = vmatpush.msra.mxu0 0.0
        %1063 = vmatpush.msra.mxu0 0.0
        %1064 = vmatpush.msra.mxu0 0.0
        %1065 = vmatpush.msra.mxu0 0.0
        %1066 = vmatpush.msra.mxu0 0.0
        %1067 = vmatpush.msra.mxu0 0.0
        %1068 = vmatpush.msra.mxu0 0.0
        %1069 = vmatpush.msra.mxu0 0.0
        %1070 = vmatpush.msra.mxu0 0.0
        %1071 = vmatpush.msra.mxu0 %v1055
        %1072 = vmatpush.msra.mxu0 %v999
        %1073 = vmatmul.f32.gmra.mxu0 %v1007
        %v1074 = vpop.f32.mrf.mxu0
        %v1075 = vadd.f32 %v1004, %v1074
        %1076 = vmatmul.f32.gmra.mxu0 %v1010
        %v1077 = vpop.f32.mrf.mxu0
        %v1078 = vadd.f32 %v1004, %v1077
        %1079 = vmatmul.f32.gmra.mxu0 %v1013
        %v1080 = vpop.f32.mrf.mxu0
        %v1081 = vadd.f32 %v1004, %v1080
        %1082 = vmatmul.f32.gmra.mxu0 %v1016
        %v1083 = vpop.f32.mrf.mxu0
        %v1084 = vadd.f32 %v1004, %v1083
        %1085 = vmatmul.f32.gmra.mxu0 %v1019
        %v1086 = vpop.f32.mrf.mxu0
        %v1087 = vadd.f32 %v1004, %v1086
        %1088 = vmatmul.f32.gmra.mxu0 %v1022
        %v1089 = vpop.f32.mrf.mxu0
        %v1090 = vadd.f32 %v1004, %v1089
        %1091 = vmatmul.f32.gmra.mxu0 %v1025
        %v1092 = vpop.f32.mrf.mxu0
        %v1093 = vadd.f32 %v1004, %v1092
        %1094 = vmatmul.f32.gmra.mxu0 %v1028
        %v1095 = vpop.f32.mrf.mxu0
        %v1096 = vadd.f32 %v1004, %v1095
        %1097 = vmatmul.f32.gmra.mxu0 %v1031
        %v1098 = vpop.f32.mrf.mxu0
        %v1099 = vadd.f32 %v1004, %v1098
        %1100 = vmatmul.f32.gmra.mxu0 %v1034
        %v1101 = vpop.f32.mrf.mxu0
        %v1102 = vadd.f32 %v1004, %v1101
        %1103 = vmatmul.f32.gmra.mxu0 %v1037
        %v1104 = vpop.f32.mrf.mxu0
        %v1105 = vadd.f32 %v1004, %v1104
        %1106 = vmatmul.f32.gmra.mxu0 %v1040
        %v1107 = vpop.f32.mrf.mxu0
        %v1108 = vadd.f32 %v1004, %v1107
        %1109 = vmatmul.f32.gmra.mxu0 %v1043
        %v1110 = vpop.f32.mrf.mxu0
        %v1111 = vadd.f32 %v1004, %v1110
        %1112 = vmatmul.f32.gmra.mxu0 %v1046
        %v1113 = vpop.f32.mrf.mxu0
        %v1114 = vadd.f32 %v1004, %v1113
        %1115 = vmatmul.f32.gmra.mxu0 %v1049
        %v1116 = vpop.f32.mrf.mxu0
        %v1117 = vadd.f32 %v1004, %v1116
        %1118 = vmatmul.f32.gmra.mxu0 %v1052
        %v1119 = vpop.f32.mrf.mxu0
        %v1120 = vadd.f32 %v1004, %v1119
        %1121 = vdwg.mxu0
        %v1122 = vmax.f32 %v1075, 0.0
        %v1123 = vmax.f32 %v1078, 0.0
        %v1124 = vmax.f32 %v1081, 0.0
        %v1125 = vmax.f32 %v1084, 0.0
        %v1126 = vmax.f32 %v1087, 0.0
        %v1127 = vmax.f32 %v1090, 0.0
        %v1128 = vmax.f32 %v1093, 0.0
        %v1129 = vmax.f32 %v1096, 0.0
        %v1130 = vmax.f32 %v1099, 0.0
        %v1131 = vmax.f32 %v1102, 0.0
        %v1132 = vmax.f32 %v1105, 0.0
        %v1133 = vmax.f32 %v1108, 0.0
        %v1134 = vmax.f32 %v1111, 0.0
        %v1135 = vmax.f32 %v1114, 0.0
        %v1136 = vmax.f32 %v1117, 0.0
        %v1137 = vmax.f32 %v1120, 0.0
        %v1138 = vld [vmem:[%s5] sm:$0xff]
        %v1139 = vld [vmem:[%s5 + $0x8] sm:$0x3]
        %v1140 = vld [vmem:[%s6] sm:$0x1]
        %v1142 = vperm.slane %v1140, 0
        %v1145 = vsel %vm444, %v1122, 0
        %v1148 = vsel %vm444, %v1123, 0
        %v1151 = vsel %vm444, %v1124, 0
        %v1154 = vsel %vm444, %v1125, 0
        %v1157 = vsel %vm444, %v1126, 0
        %v1160 = vsel %vm444, %v1127, 0
        %v1163 = vsel %vm444, %v1128, 0
        %v1166 = vsel %vm444, %v1129, 0
        %v1169 = vsel %vm444, %v1130, 0
        %v1172 = vsel %vm444, %v1131, 0
        %v1175 = vsel %vm444, %v1132, 0
        %v1178 = vsel %vm444, %v1133, 0
        %v1181 = vsel %vm444, %v1134, 0
        %v1184 = vsel %vm444, %v1135, 0
        %v1187 = vsel %vm444, %v1136, 0
        %v1190 = vsel %vm444, %v1137, 0
        %v1193 = vsel %vm493, %v1139, 0
        %1195 = vmatpush.msra.mxu0 0.0
        %1196 = vmatpush.msra.mxu0 0.0
        %1197 = vmatpush.msra.mxu0 0.0
        %1198 = vmatpush.msra.mxu0 0.0
        %1199 = vmatpush.msra.mxu0 0.0
        %1200 = vmatpush.msra.mxu0 0.0
        %1201 = vmatpush.msra.mxu0 0.0
        %1202 = vmatpush.msra.mxu0 0.0
        %1203 = vmatpush.msra.mxu0 0.0
        %1204 = vmatpush.msra.mxu0 0.0
        %1205 = vmatpush.msra.mxu0 0.0
        %1206 = vmatpush.msra.mxu0 0.0
        %1207 = vmatpush.msra.mxu0 0.0
        %1208 = vmatpush.msra.mxu0 0.0
        %1209 = vmatpush.msra.mxu0 %v1193
        %1210 = vmatpush.msra.mxu0 %v1138
        %1211 = vmatmul.f32.gmra.mxu0 %v1145
        %v1212 = vpop.f32.mrf.mxu0
        %v1213 = vadd.f32 %v1142, %v1212
        %1214 = vmatmul.f32.gmra.mxu0 %v1148
        %v1215 = vpop.f32.mrf.mxu0
        %v1216 = vadd.f32 %v1142, %v1215
        %1217 = vmatmul.f32.gmra.mxu0 %v1151
        %v1218 = vpop.f32.mrf.mxu0
        %v1219 = vadd.f32 %v1142, %v1218
        %1220 = vmatmul.f32.gmra.mxu0 %v1154
        %v1221 = vpop.f32.mrf.mxu0
        %v1222 = vadd.f32 %v1142, %v1221
        %1223 = vmatmul.f32.gmra.mxu0 %v1157
        %v1224 = vpop.f32.mrf.mxu0
        %v1225 = vadd.f32 %v1142, %v1224
        %1226 = vmatmul.f32.gmra.mxu0 %v1160
        %v1227 = vpop.f32.mrf.mxu0
        %v1228 = vadd.f32 %v1142, %v1227
        %1229 = vmatmul.f32.gmra.mxu0 %v1163
        %v1230 = vpop.f32.mrf.mxu0
        %v1231 = vadd.f32 %v1142, %v1230
        %1232 = vmatmul.f32.gmra.mxu0 %v1166
        %v1233 = vpop.f32.mrf.mxu0
        %v1234 = vadd.f32 %v1142, %v1233
        %1235 = vmatmul.f32.gmra.mxu0 %v1169
        %v1236 = vpop.f32.mrf.mxu0
        %v1237 = vadd.f32 %v1142, %v1236
        %1238 = vmatmul.f32.gmra.mxu0 %v1172
        %v1239 = vpop.f32.mrf.mxu0
        %v1240 = vadd.f32 %v1142, %v1239
        %1241 = vmatmul.f32.gmra.mxu0 %v1175
        %v1242 = vpop.f32.mrf.mxu0
        %v1243 = vadd.f32 %v1142, %v1242
        %1244 = vmatmul.f32.gmra.mxu0 %v1178
        %v1245 = vpop.f32.mrf.mxu0
        %v1246 = vadd.f32 %v1142, %v1245
        %1247 = vmatmul.f32.gmra.mxu0 %v1181
        %v1248 = vpop.f32.mrf.mxu0
        %v1249 = vadd.f32 %v1142, %v1248
        %1250 = vmatmul.f32.gmra.mxu0 %v1184
        %v1251 = vpop.f32.mrf.mxu0
        %v1252 = vadd.f32 %v1142, %v1251
        %1253 = vmatmul.f32.gmra.mxu0 %v1187
        %v1254 = vpop.f32.mrf.mxu0
        %v1255 = vadd.f32 %v1142, %v1254
        %1256 = vmatmul.f32.gmra.mxu0 %v1190
        %v1257 = vpop.f32.mrf.mxu0
        %v1258 = vadd.f32 %v1142, %v1257
        %1259 = vdwg.mxu0
        %vm1260 = vcmask 31744
        %1261 = vst.msk [vmem:[%s280] sm:$0xff] %vm1260, %v1213
        %1262 = vst.msk [vmem:[%s280 + $0x8] sm:$0xff] %vm1260, %v1216
        %1263 = vst.msk [vmem:[%s280 + $0x10] sm:$0xff] %vm1260, %v1219
        %1264 = vst.msk [vmem:[%s280 + $0x18] sm:$0xff] %vm1260, %v1222
        %1265 = vst.msk [vmem:[%s280 + $0x20] sm:$0xff] %vm1260, %v1225
        %1266 = vst.msk [vmem:[%s280 + $0x28] sm:$0xff] %vm1260, %v1228
        %1267 = vst.msk [vmem:[%s280 + $0x30] sm:$0xff] %vm1260, %v1231
        %1268 = vst.msk [vmem:[%s280 + $0x38] sm:$0xff] %vm1260, %v1234
        %1269 = vst.msk [vmem:[%s280 + $0x40] sm:$0xff] %vm1260, %v1237
        %1270 = vst.msk [vmem:[%s280 + $0x48] sm:$0xff] %vm1260, %v1240
        %1271 = vst.msk [vmem:[%s280 + $0x50] sm:$0xff] %vm1260, %v1243
        %1272 = vst.msk [vmem:[%s280 + $0x58] sm:$0xff] %vm1260, %v1246
        %1273 = vst.msk [vmem:[%s280 + $0x60] sm:$0xff] %vm1260, %v1249
        %1274 = vst.msk [vmem:[%s280 + $0x68] sm:$0xff] %vm1260, %v1252
        %1275 = vst.msk [vmem:[%s280 + $0x70] sm:$0xff] %vm1260, %v1255
        %1276 = vst.msk [vmem:[%s280 + $0x78] sm:$0xff] %vm1260, %v1258
        %s1277 = sand.u32 %s178, 1
        %s1278 = sand.u32 %s178, 1
        %s1279 = smul.addr %s1278, 128
        %s1280 = scalar_lea.vmem [#allocation2], %s1279
        // Predicated region
        $region49: #{tpu_custom_call.1} parent=47 // pred_check
          %p1281 = pneg %p188
        $region50: #{tpu_custom_call.1} parent=47 // pred_check_branch
          %1283 = sbr.rel (%p1281) target = $region52
        $region51: #{tpu_custom_call.1} parent=47 // pred_region
          %s1284 = smul.u32 16, %s18
          %s1285 = ssub.s32 38, %s1284
          %p1286 = scmp.lt.s32.totalorder %s1285, 16
          %s1287 = scalar_select %p1286, %s1285, 16
          %s1288 = smul.u32 8, %s1287
          %p1289 = scmp.ne.s32.totalorder 0, %s1288
          %s1290 = smul.addr %s1284, 8
          %s1291 = scalar_lea.vmem %s7, %s1290
          // Predicated region
          $region53: #{tpu_custom_call.1} parent=51 // pred_check
            %p1292 = pneg %p1289
          $region54: #{tpu_custom_call.1} parent=51 // pred_check_branch
            %1294 = sbr.rel (%p1292) target = $region56
          $region55: #{tpu_custom_call.1} parent=51 // pred_region
            // Predicated region
            $region57: #{tpu_custom_call.1} parent=55 // pred_check
              _
            $region58: #{tpu_custom_call.1} parent=55 // pred_check_branch
              %1296 = sbr.rel (0) target = $region60
            $region59: #{tpu_custom_call.1} parent=55 // pred_region
              // Predicated region
              $region79: #{tpu_custom_call.1} parent=59 // pred_check
                _
              $region80: #{tpu_custom_call.1} parent=59 // pred_check_branch
                %1376 = sbr.rel (0) target = $region82
              $region81: #{tpu_custom_call.1} parent=59 // pred_region
                %s1377 = sshrl.u32 %s1287, 4
                // While loop
                $region83: #{tpu_custom_call.1} parent=81 // loop_pre_header
                  _
                $region84: #{tpu_custom_call.1} parent=81 // loop_header
                  %s1379 = sphi 0, %s1381
                  %p1380 = scmp.ge.s32.totalorder %s1379, %s1377
                  %s1384 = sphi 0, %s1421
                  %s1385 = sphi %s1280, %s1424
                  %s1386 = sphi %s1291, %s1425
                $region85: #{tpu_custom_call.1} parent=81 // loop_header_branch
                  %1383 = sbr.rel (%p1380) target = $region89
                $region86: #{tpu_custom_call.1} parent=81 // loop_body
                  %v1387 = vld [vmem:[%s1385] sm:$0xff]
                  %1388 = vst [vmem:[%s1386] sm:$0xff] %v1387
                  %v1389 = vld [vmem:[%s1385 + $0x8] sm:$0xff]
                  %1390 = vst [vmem:[%s1386 + $0x8] sm:$0xff] %v1389
                  %v1391 = vld [vmem:[%s1385 + $0x10] sm:$0xff]
                  %1392 = vst [vmem:[%s1386 + $0x10] sm:$0xff] %v1391
                  %v1393 = vld [vmem:[%s1385 + $0x18] sm:$0xff]
                  %1394 = vst [vmem:[%s1386 + $0x18] sm:$0xff] %v1393
                  %v1395 = vld [vmem:[%s1385 + $0x20] sm:$0xff]
                  %1396 = vst [vmem:[%s1386 + $0x20] sm:$0xff] %v1395
                  %v1397 = vld [vmem:[%s1385 + $0x28] sm:$0xff]
                  %1398 = vst [vmem:[%s1386 + $0x28] sm:$0xff] %v1397
                  %v1399 = vld [vmem:[%s1385 + $0x30] sm:$0xff]
                  %1400 = vst [vmem:[%s1386 + $0x30] sm:$0xff] %v1399
                  %v1401 = vld [vmem:[%s1385 + $0x38] sm:$0xff]
                  %1402 = vst [vmem:[%s1386 + $0x38] sm:$0xff] %v1401
                  %v1403 = vld [vmem:[%s1385 + $0x40] sm:$0xff]
                  %1404 = vst [vmem:[%s1386 + $0x40] sm:$0xff] %v1403
                  %v1405 = vld [vmem:[%s1385 + $0x48] sm:$0xff]
                  %1406 = vst [vmem:[%s1386 + $0x48] sm:$0xff] %v1405
                  %v1407 = vld [vmem:[%s1385 + $0x50] sm:$0xff]
                  %1408 = vst [vmem:[%s1386 + $0x50] sm:$0xff] %v1407
                  %v1409 = vld [vmem:[%s1385 + $0x58] sm:$0xff]
                  %1410 = vst [vmem:[%s1386 + $0x58] sm:$0xff] %v1409
                  %v1411 = vld [vmem:[%s1385 + $0x60] sm:$0xff]
                  %1412 = vst [vmem:[%s1386 + $0x60] sm:$0xff] %v1411
                  %v1413 = vld [vmem:[%s1385 + $0x68] sm:$0xff]
                  %1414 = vst [vmem:[%s1386 + $0x68] sm:$0xff] %v1413
                  %v1415 = vld [vmem:[%s1385 + $0x70] sm:$0xff]
                  %1416 = vst [vmem:[%s1386 + $0x70] sm:$0xff] %v1415
                  %v1417 = vld [vmem:[%s1385 + $0x78] sm:$0xff]
                  %1418 = vst [vmem:[%s1386 + $0x78] sm:$0xff] %v1417
                  %s1419 = sadd.s32 1, %s1384
                  %p1420 = scmp.ge.s32.totalorder %s1419, %s1377
                  %s1421 = scalar_select %p1420, 0, %s1419
                  %s1422 = smul.u32 %s1421, 128
                  %s1423 = smul.u32 %s1421, 128
                  %s1424 = scalar_lea.vmem %s1280, %s1422 [#allocation2]
                  %s1425 = scalar_lea.vmem %s1291, %s1423
                $region87: #{tpu_custom_call.1} parent=81 // loop_footer
                  %s1381 = sadd.s32 %s1379, 1
                $region88: #{tpu_custom_call.1} parent=81 // loop_footer_branch
                  %1378 = sbr.rel target = $region84
                $region89: #{tpu_custom_call.1} parent=81 // loop_exit
                  _
                %s1426 = sshrl.u32 %s1287, 4
                %s1427 = sand.u32 %s1287, 15
                %s1428 = smul.u32 %s1426, 16
                %s1429 = smul.u32 8, %s1428
                %s1430 = scalar_lea.vmem %s1280, %s1429 [#allocation2]
                %s1431 = smul.u32 8, %s1428
                %s1432 = scalar_lea.vmem %s1291, %s1431
                // While loop
                $region90: #{tpu_custom_call.1} parent=81 // loop_pre_header
                  _
                $region91: #{tpu_custom_call.1} parent=81 // loop_header
                  %s1434 = sphi 0, %s1436
                  %p1435 = scmp.ge.s32.totalorder %s1434, %s1427
                  %s1439 = sphi 0, %s1446
                  %s1440 = sphi %s1430, %s1449
                  %s1441 = sphi %s1432, %s1450
                $region92: #{tpu_custom_call.1} parent=81 // loop_header_branch
                  %1438 = sbr.rel (%p1435) target = $region96
                $region93: #{tpu_custom_call.1} parent=81 // loop_body
                  %v1442 = vld [vmem:[%s1440] sm:$0xff]
                  %1443 = vst [vmem:[%s1441] sm:$0xff] %v1442
                  %s1444 = sadd.s32 1, %s1439
                  %p1445 = scmp.ge.s32.totalorder %s1444, %s1427
                  %s1446 = scalar_select %p1445, 0, %s1444
                  %s1447 = smul.u32 %s1446, 8
                  %s1448 = smul.u32 %s1446, 8
                  %s1449 = scalar_lea.vmem %s1430, %s1447 [#allocation2]
                  %s1450 = scalar_lea.vmem %s1432, %s1448
                $region94: #{tpu_custom_call.1} parent=81 // loop_footer
                  %s1436 = sadd.s32 %s1434, 1
                $region95: #{tpu_custom_call.1} parent=81 // loop_footer_branch
                  %1433 = sbr.rel target = $region91
                $region96: #{tpu_custom_call.1} parent=81 // loop_exit
                  _
              $region82: #{tpu_custom_call.1} parent=59 // pred_fallthru
                _
              // Predicated region
              $region97: #{tpu_custom_call.1} parent=59 // pred_check
                _
              $region98: #{tpu_custom_call.1} parent=59 // pred_check_branch
                %1452 = sbr.rel target = $region100
              $region99: #{tpu_custom_call.1} parent=59 // pred_region
                _
              $region100: #{tpu_custom_call.1} parent=59 // pred_fallthru
                _
            $region60: #{tpu_custom_call.1} parent=55 // pred_fallthru
              _
            // Predicated region
            $region61: #{tpu_custom_call.1} parent=55 // pred_check
              _
            $region62: #{tpu_custom_call.1} parent=55 // pred_check_branch
              %1298 = sbr.rel target = $region64
            $region63: #{tpu_custom_call.1} parent=55 // pred_region
              %s1300 = ssub.s32 256, 1
              %s1301 = sshrl.u32 %s1287, 4
              // While loop
              $region65: #{tpu_custom_call.1} parent=63 // loop_pre_header
                _
              $region66: #{tpu_custom_call.1} parent=63 // loop_header
                %s1303 = sphi 0, %s1305
                %p1304 = scmp.ge.s32.totalorder %s1303, %s1301
                %s1308 = sphi 0, %s1345
                %s1309 = sphi %s1280, %s1348
                %s1310 = sphi %s1291, %s1349
              $region67: #{tpu_custom_call.1} parent=63 // loop_header_branch
                %1307 = sbr.rel (%p1304) target = $region71
              $region68: #{tpu_custom_call.1} parent=63 // loop_body
                %v1311 = vld [vmem:[%s1309] sm:%s1300]
                %1312 = vst [vmem:[%s1310] sm:%s1300] %v1311
                %v1313 = vld [vmem:[%s1309 + $0x8] sm:%s1300]
                %1314 = vst [vmem:[%s1310 + $0x8] sm:%s1300] %v1313
                %v1315 = vld [vmem:[%s1309 + $0x10] sm:%s1300]
                %1316 = vst [vmem:[%s1310 + $0x10] sm:%s1300] %v1315
                %v1317 = vld [vmem:[%s1309 + $0x18] sm:%s1300]
                %1318 = vst [vmem:[%s1310 + $0x18] sm:%s1300] %v1317
                %v1319 = vld [vmem:[%s1309 + $0x20] sm:%s1300]
                %1320 = vst [vmem:[%s1310 + $0x20] sm:%s1300] %v1319
                %v1321 = vld [vmem:[%s1309 + $0x28] sm:%s1300]
                %1322 = vst [vmem:[%s1310 + $0x28] sm:%s1300] %v1321
                %v1323 = vld [vmem:[%s1309 + $0x30] sm:%s1300]
                %1324 = vst [vmem:[%s1310 + $0x30] sm:%s1300] %v1323
                %v1325 = vld [vmem:[%s1309 + $0x38] sm:%s1300]
                %1326 = vst [vmem:[%s1310 + $0x38] sm:%s1300] %v1325
                %v1327 = vld [vmem:[%s1309 + $0x40] sm:%s1300]
                %1328 = vst [vmem:[%s1310 + $0x40] sm:%s1300] %v1327
                %v1329 = vld [vmem:[%s1309 + $0x48] sm:%s1300]
                %1330 = vst [vmem:[%s1310 + $0x48] sm:%s1300] %v1329
                %v1331 = vld [vmem:[%s1309 + $0x50] sm:%s1300]
                %1332 = vst [vmem:[%s1310 + $0x50] sm:%s1300] %v1331
                %v1333 = vld [vmem:[%s1309 + $0x58] sm:%s1300]
                %1334 = vst [vmem:[%s1310 + $0x58] sm:%s1300] %v1333
                %v1335 = vld [vmem:[%s1309 + $0x60] sm:%s1300]
                %1336 = vst [vmem:[%s1310 + $0x60] sm:%s1300] %v1335
                %v1337 = vld [vmem:[%s1309 + $0x68] sm:%s1300]
                %1338 = vst [vmem:[%s1310 + $0x68] sm:%s1300] %v1337
                %v1339 = vld [vmem:[%s1309 + $0x70] sm:%s1300]
                %1340 = vst [vmem:[%s1310 + $0x70] sm:%s1300] %v1339
                %v1341 = vld [vmem:[%s1309 + $0x78] sm:%s1300]
                %1342 = vst [vmem:[%s1310 + $0x78] sm:%s1300] %v1341
                %s1343 = sadd.s32 1, %s1308
                %p1344 = scmp.ge.s32.totalorder %s1343, %s1301
                %s1345 = scalar_select %p1344, 0, %s1343
                %s1346 = smul.u32 %s1345, 128
                %s1347 = smul.u32 %s1345, 128
                %s1348 = scalar_lea.vmem %s1280, %s1346 [#allocation2]
                %s1349 = scalar_lea.vmem %s1291, %s1347
              $region69: #{tpu_custom_call.1} parent=63 // loop_footer
                %s1305 = sadd.s32 %s1303, 1
              $region70: #{tpu_custom_call.1} parent=63 // loop_footer_branch
                %1302 = sbr.rel target = $region66
              $region71: #{tpu_custom_call.1} parent=63 // loop_exit
                _
              %s1350 = sshrl.u32 %s1287, 4
              %s1351 = sand.u32 %s1287, 15
              %s1352 = smul.u32 %s1350, 16
              %s1353 = smul.u32 8, %s1352
              %s1354 = scalar_lea.vmem %s1280, %s1353 [#allocation2]
              %s1355 = smul.u32 8, %s1352
              %s1356 = scalar_lea.vmem %s1291, %s1355
              // While loop
              $region72: #{tpu_custom_call.1} parent=63 // loop_pre_header
                _
              $region73: #{tpu_custom_call.1} parent=63 // loop_header
                %s1358 = sphi 0, %s1360
                %p1359 = scmp.ge.s32.totalorder %s1358, %s1351
                %s1363 = sphi 0, %s1370
                %s1364 = sphi %s1354, %s1373
                %s1365 = sphi %s1356, %s1374
              $region74: #{tpu_custom_call.1} parent=63 // loop_header_branch
                %1362 = sbr.rel (%p1359) target = $region78
              $region75: #{tpu_custom_call.1} parent=63 // loop_body
                %v1366 = vld [vmem:[%s1364] sm:%s1300]
                %1367 = vst [vmem:[%s1365] sm:%s1300] %v1366
                %s1368 = sadd.s32 1, %s1363
                %p1369 = scmp.ge.s32.totalorder %s1368, %s1351
                %s1370 = scalar_select %p1369, 0, %s1368
                %s1371 = smul.u32 %s1370, 8
                %s1372 = smul.u32 %s1370, 8
                %s1373 = scalar_lea.vmem %s1354, %s1371 [#allocation2]
                %s1374 = scalar_lea.vmem %s1356, %s1372
              $region76: #{tpu_custom_call.1} parent=63 // loop_footer
                %s1360 = sadd.s32 %s1358, 1
              $region77: #{tpu_custom_call.1} parent=63 // loop_footer_branch
                %1357 = sbr.rel target = $region73
              $region78: #{tpu_custom_call.1} parent=63 // loop_exit
                _
            $region64: #{tpu_custom_call.1} parent=55 // pred_fallthru
              _
          $region56: #{tpu_custom_call.1} parent=51 // pred_fallthru
            _
          %1453 = vnop
        $region52: #{tpu_custom_call.1} parent=47 // pred_fallthru
          _
      $region48: #{tpu_custom_call.1} parent=5 // pred_fallthru
        _
      %p1454 = scmp.le.s32.totalorder 2, %s13
      // Predicated region
      $region101: #{tpu_custom_call.1} parent=5 // pred_check
        %p1455 = pneg %p1454
      $region102: #{tpu_custom_call.1} parent=5 // pred_check_branch
        %1457 = sbr.rel (%p1455) target = $region104
      $region103: #{tpu_custom_call.1} parent=5 // pred_region
        %s1458 = ssub.s32 %s13, 2
        // Predicated region
        $region105: #{tpu_custom_call.1} parent=103 // pred_check
          %p1459 = pneg %p194
        $region106: #{tpu_custom_call.1} parent=103 // pred_check_branch
          %1461 = sbr.rel (%p1459) target = $region108
        $region107: #{tpu_custom_call.1} parent=103 // pred_region
          %s1462 = sand.u32 %s179, 1
          %s1463 = sand.u32 %s179, 1
          %s1464 = smul.addr %s1463, 128
          %s1465 = scalar_lea.vmem [#allocation2], %s1464
        $region108: #{tpu_custom_call.1} parent=103 // pred_fallthru
          _
      $region104: #{tpu_custom_call.1} parent=5 // pred_fallthru
        _
    $region6: #{tpu_custom_call.1} parent=1 // loop_footer
      %s17 = sadd.s32 1, %s13
    $region7: #{tpu_custom_call.1} parent=1 // loop_footer_branch
      %12 = sbr.rel target = $region3
    $region8: #{tpu_custom_call.1} parent=1 // loop_exit
      _

</llo_original>
